<compile_context>
chip_gen: v5e
topology: v5e:2x2
jax: 0.10.0
libtpu: 0.0.40
codegen_flags: <defaults>
</compile_context>

<pallas_src>
import jax
import jax.numpy as jnp
from jax.experimental import pallas as pl
from jax.experimental.pallas import tpu as pltpu


def mlp_kernel(xT_ref, w1_ref, b1_ref, w2_ref, b2_ref, oT_ref):
    # xT_ref: (10, TB) -- batch on the lane axis; lane-dense VPU/EUP work and unmasked stores.
    xT = xT_ref[...]
    # h^T = W1 @ x^T + b1   (W1 is (out, in) == PyTorch nn.Linear layout; y = x @ W^T + b)
    h = jnp.dot(w1_ref[...], xT, preferred_element_type=jnp.float32) + b1_ref[...]
    h = jnp.maximum(h, 0.0)                                           # ReLU (VPU)
    # y^T = W2 @ h^T + b2
    y = jnp.dot(w2_ref[...], h, preferred_element_type=jnp.float32) + b2_ref[...]
    # sigmoid(y) == 0.5 * (1 + tanh(y/2)) -> one EUP push per vreg instead of exp + reciprocal.
    oT_ref[...] = (0.5 * (jnp.tanh(0.5 * y) + 1.0)).astype(oT_ref.dtype)


def _round_up(n, m):
    return ((n + m - 1) // m) * m


def _cdiv(a, b):
    return -(-a // b)


def mlp_forward_t(xT, w1, b1, w2, b2, *, tb=65536):
    """Transposed-layout core: xT is (10, B) f32 (features-major, batch on lanes).

    Returns (10, B). Use this directly when composing with other transposed-layout kernels
    to avoid boundary transposes entirely.
    """
    in_f, B = xT.shape
    out_f = w2.shape[0]

    # Lane-aligned, VMEM-safe batch tile:
    #   - multiple of 128 (lane width), caller value rounded up if needed;
    #   - capped at 131072 so double-buffered x/out blocks (~160*TB bytes) stay ~21 MiB,
    #     comfortably under the 32 MiB scoped VMEM limit even on v7x (64 MiB physical);
    #   - balanced across blocks to keep pad waste < 128 columns per block;
    #   - >= 2 blocks whenever the batch allows, so v7x's second TensorCore has work.
    tb = max(128, min(_round_up(int(tb), 128), 131072))
    B128 = _round_up(B, 128)
    num_blocks = max(1, _cdiv(B128, tb))
    if B128 >= 256:
        num_blocks = max(num_blocks, 2)
    TB = _round_up(_cdiv(B128, num_blocks), 128)
    grid_n = _cdiv(B128, TB)
    Bp = grid_n * TB

    xT_p = jnp.pad(xT, ((0, 0), (0, Bp - B))) if Bp != B else xT
    b1_col = b1.reshape(out_f, 1)        # broadcast along lanes in-kernel
    b2_col = b2.reshape(out_f, 1)

    cost = pl.CostEstimate(
        flops=2 * Bp * in_f * out_f + 2 * Bp * out_f * out_f,          # two matmuls on padded batch
        transcendentals=Bp * out_f,                                    # one tanh per output element
        bytes_accessed=(in_f * Bp + out_f * Bp
                        + w1.size + b1.size + w2.size + b2.size) * 4,  # actual kernel HBM traffic
    )

    oT = pl.pallas_call(
        mlp_kernel,
        out_shape=jax.ShapeDtypeStruct((out_f, Bp), xT.dtype),
        grid=(grid_n,),
        in_specs=[
            pl.BlockSpec((in_f, TB), lambda i: (0, i)),        # x^T block (double-buffered DMA)
            pl.BlockSpec((out_f, in_f), lambda i: (0, 0)),     # W1: VMEM-resident
            pl.BlockSpec((out_f, 1), lambda i: (0, 0)),        # b1: VMEM-resident
            pl.BlockSpec((out_f, out_f), lambda i: (0, 0)),    # W2: VMEM-resident
            pl.BlockSpec((out_f, 1), lambda i: (0, 0)),        # b2: VMEM-resident
        ],
        out_specs=pl.BlockSpec((out_f, TB), lambda i: (0, i)), # lane-dense output block
        compiler_params=pltpu.CompilerParams(
            dimension_semantics=("parallel",),                 # shard batch blocks across TCs (v7x)
            vmem_limit_bytes=32 * 1024 * 1024,                 # safe on v5e/v6e/v7x
        ),
        cost_estimate=cost,
    )(xT_p, w1, b1_col, w2, b2_col)

    return oT[:, :B] if Bp != B else oT


def mlp_forward(x, w1, b1, w2, b2, *, tb=65536):
    """(B, 10) -> (B, 10) boundary wrapper matching the PyTorch module's interface.

    The transposes here exist only to satisfy the (B, 10) boundary; prefer mlp_forward_t
    when the producer/consumer can work in (features, batch) layout.
    """
    return mlp_forward_t(x.T, w1, b1, w2, b2, tb=tb).T


def init_params(key, in_f=10, out_f=10):
    # Deterministic init mimicking PyTorch nn.Linear default: U(-1/sqrt(fan_in), +1/sqrt(fan_in)).
    # Weights kept in PyTorch's native (out_features, in_features) layout.
    k1, k2, k3, k4 = jax.random.split(key, 4)
    bound = 1.0 / jnp.sqrt(in_f)
    w1 = jax.random.uniform(k1, (out_f, in_f), jnp.float32, -bound, bound)
    b1 = jax.random.uniform(k2, (out_f,), jnp.float32, -bound, bound)
    w2 = jax.random.uniform(k3, (out_f, in_f), jnp.float32, -bound, bound)
    b2 = jax.random.uniform(k4, (out_f,), jnp.float32, -bound, bound)
    return w1, b1, w2, b2


if __name__ == "__main__":
    key = jax.random.PRNGKey(0)
    kx, kp = jax.random.split(key)

    batch = 8
    x = jax.random.normal(kx, (batch, 10), jnp.float32)
    w1, b1, w2, b2 = init_params(kp)

    out = mlp_forward(x, w1, b1, w2, b2)
    jax.block_until_ready(out)

    # Reference in plain JAX (same math as the PyTorch module: y = x @ W^T + b).
    ref = jax.nn.sigmoid(jnp.maximum(x @ w1.T + b1, 0.0) @ w2.T + b2)
    assert out.shape == (batch, 10)
    assert jnp.allclose(out, ref, atol=1e-5, rtol=1e-5)

    # Also exercise the transposed-layout core path on a batch spanning multiple blocks.
    x2 = jax.random.normal(kx, (10, 300), jnp.float32)       # (features, batch)
    out2 = jax.block_until_ready(mlp_forward_t(x2, w1, b1, w2, b2, tb=128))
    ref2 = jax.nn.sigmoid(w2 @ jnp.maximum(w1 @ x2 + b1[:, None], 0.0) + b2[:, None])
    assert out2.shape == (10, 300)
    assert jnp.allclose(out2, ref2, atol=1e-5, rtol=1e-5)

    print("KERNEL_OK")
</pallas_src>

<mosaic_0001>
module attributes {stable_mosaic.version = 11 : i64} {
  func.func @mlp_kernel(%arg0: i32, %arg1: memref<10x128xf32, #tpu.memory_space<vmem>>, %arg2: memref<10x10xf32, #tpu.memory_space<vmem>>, %arg3: memref<10x1xf32, #tpu.memory_space<vmem>>, %arg4: memref<10x10xf32, #tpu.memory_space<vmem>>, %arg5: memref<10x1xf32, #tpu.memory_space<vmem>>, %arg6: memref<10x128xf32, #tpu.memory_space<vmem>>) attributes {dimension_semantics = [#tpu.dimension_semantics<parallel>], iteration_bounds = array<i64: 1>, scalar_prefetch = 0 : i64, scratch_operands = 0 : i64, tpu.core_type = #tpu.core_type<tc>, window_params = [{transform_indices = @transform_0, window_bounds = array<i64: 10, 128>}, {pipeline_mode = #tpu.pipeline_mode<synchronous>, transform_indices = @transform_1, window_bounds = array<i64: 10, 10>}, {pipeline_mode = #tpu.pipeline_mode<synchronous>, transform_indices = @transform_2, window_bounds = array<i64: 10, 1>}, {pipeline_mode = #tpu.pipeline_mode<synchronous>, transform_indices = @transform_3, window_bounds = array<i64: 10, 10>}, {pipeline_mode = #tpu.pipeline_mode<synchronous>, transform_indices = @transform_4, window_bounds = array<i64: 10, 1>}, {transform_indices = @transform_5, window_bounds = array<i64: 10, 128>}]} {
    %c0 = arith.constant 0 : index
    %c0_0 = arith.constant 0 : index
    %0 = vector.load %arg1[%c0, %c0_0] : memref<10x128xf32, #tpu.memory_space<vmem>>, vector<10x128xf32>
    %c0_1 = arith.constant 0 : index
    %c0_2 = arith.constant 0 : index
    %1 = vector.load %arg2[%c0_1, %c0_2] : memref<10x10xf32, #tpu.memory_space<vmem>>, vector<10x10xf32>
    %cst = arith.constant dense<0.000000e+00> : vector<10x128xf32>
    %2 = tpu.matmul %1, %0, %cst {dimension_numbers = #tpu.dot_dimension_numbers<[1], [0], [0], [1], [0, 0, 1, 1], [], []>} : vector<10x10xf32>, vector<10x128xf32>, vector<10x128xf32> -> vector<10x128xf32>
    %c0_3 = arith.constant 0 : index
    %c0_4 = arith.constant 0 : index
    %3 = vector.load %arg3[%c0_3, %c0_4] : memref<10x1xf32, #tpu.memory_space<vmem>>, vector<10x1xf32>
    %4 = vector.broadcast %3 : vector<10x1xf32> to vector<10x128xf32>
    %5 = arith.addf %2, %4 : vector<10x128xf32>
    %cst_5 = arith.constant 0.000000e+00 : f32
    %6 = vector.broadcast %cst_5 : f32 to vector<10x128xf32>
    %7 = arith.maximumf %5, %6 : vector<10x128xf32>
    %c0_6 = arith.constant 0 : index
    %c0_7 = arith.constant 0 : index
    %8 = vector.load %arg4[%c0_6, %c0_7] : memref<10x10xf32, #tpu.memory_space<vmem>>, vector<10x10xf32>
    %cst_8 = arith.constant dense<0.000000e+00> : vector<10x128xf32>
    %9 = tpu.matmul %8, %7, %cst_8 {dimension_numbers = #tpu.dot_dimension_numbers<[1], [0], [0], [1], [0, 0, 1, 1], [], []>} : vector<10x10xf32>, vector<10x128xf32>, vector<10x128xf32> -> vector<10x128xf32>
    %c0_9 = arith.constant 0 : index
    %c0_10 = arith.constant 0 : index
    %10 = vector.load %arg5[%c0_9, %c0_10] : memref<10x1xf32, #tpu.memory_space<vmem>>, vector<10x1xf32>
    %11 = vector.broadcast %10 : vector<10x1xf32> to vector<10x128xf32>
    %12 = arith.addf %9, %11 : vector<10x128xf32>
    %cst_11 = arith.constant 5.000000e-01 : f32
    %13 = vector.broadcast %cst_11 : f32 to vector<10x128xf32>
    %14 = arith.mulf %13, %12 : vector<10x128xf32>
    %15 = math.tanh %14 : vector<10x128xf32>
    %cst_12 = arith.constant 1.000000e+00 : f32
    %16 = vector.broadcast %cst_12 : f32 to vector<10x128xf32>
    %17 = arith.addf %15, %16 : vector<10x128xf32>
    %cst_13 = arith.constant 5.000000e-01 : f32
    %18 = vector.broadcast %cst_13 : f32 to vector<10x128xf32>
    %19 = arith.mulf %18, %17 : vector<10x128xf32>
    %c0_14 = arith.constant 0 : index
    %c0_15 = arith.constant 0 : index
    %20 = vector.load %arg6[%c0_14, %c0_15] : memref<10x128xf32, #tpu.memory_space<vmem>>, vector<10x128xf32>
    tpu.vector_store %arg6[%c0_14, %c0_15], %19 {strides = array<i32>} : memref<10x128xf32, #tpu.memory_space<vmem>>, vector<10x128xf32>,
    return
  }
  func.func @transform_0(%arg0: i32) -> (i32, i32) {
    %c0_i32 = arith.constant 0 : i32
    %c0_i32_0 = arith.constant 0 : i32
    return %c0_i32, %arg0 : i32, i32
  }
  func.func @transform_1(%arg0: i32) -> (i32, i32) {
    %c0_i32 = arith.constant 0 : i32
    %c0_i32_0 = arith.constant 0 : i32
    %c0_i32_1 = arith.constant 0 : i32
    return %c0_i32, %c0_i32_0 : i32, i32
  }
  func.func @transform_2(%arg0: i32) -> (i32, i32) {
    %c0_i32 = arith.constant 0 : i32
    %c0_i32_0 = arith.constant 0 : i32
    %c0_i32_1 = arith.constant 0 : i32
    return %c0_i32, %c0_i32_0 : i32, i32
  }
  func.func @transform_3(%arg0: i32) -> (i32, i32) {
    %c0_i32 = arith.constant 0 : i32
    %c0_i32_0 = arith.constant 0 : i32
    %c0_i32_1 = arith.constant 0 : i32
    return %c0_i32, %c0_i32_0 : i32, i32
  }
  func.func @transform_4(%arg0: i32) -> (i32, i32) {
    %c0_i32 = arith.constant 0 : i32
    %c0_i32_0 = arith.constant 0 : i32
    %c0_i32_1 = arith.constant 0 : i32
    return %c0_i32, %c0_i32_0 : i32, i32
  }
  func.func @transform_5(%arg0: i32) -> (i32, i32) {
    %c0_i32 = arith.constant 0 : i32
    %c0_i32_0 = arith.constant 0 : i32
    return %c0_i32, %arg0 : i32, i32
  }
}

</mosaic_0001>

<llo_original>
// kernel: tpu_custom_call.1
$region0: #{tpu_custom_call.1}
  #allocation0 [shape = 'u32[]', space=smem, size = 0x4, offset = 0x4, fixed_abs, tag = 'smem constant byte address 0x4 - core index']
  #allocation1 [shape = 'u32[72,128]{1,0:T(1,128)}', space=vmem, size = 0x9000, scoped, tag = 'internal scratch']
  %s0 = inlined_call_operand.vmem [shape: f32[10,128], index: 0, kind: input, shape index: {}]
  %s1 = inlined_call_operand.vmem [shape: f32[10,10], index: 1, kind: input, shape index: {}]
  %s2 = inlined_call_operand.vmem [shape: f32[10,1], index: 2, kind: input, shape index: {}]
  %s3 = inlined_call_operand.hbm [shape: f32[10,10], index: 3, kind: input, shape index: {}]
  %s4 = inlined_call_operand.vmem [shape: f32[10,1], index: 4, kind: input, shape index: {}]
  %s5 = inlined_call_operand.hbm [shape: f32[10,128], index: 5, kind: output, shape index: {}]
  %s6 = sld [smem:[#allocation0]]
  $region34: #{tpu_custom_call.1} parent=0
    _
  %s8 = ssub.s32 1, %s6
  %s9 = scalar_select 0, %s8, %s6
  $region1: #{tpu_custom_call.1} parent=0
    #allocation2 [shape = 'u8[8192]{0}', space=vmem, size = 0x2000, scoped, tag = 'input window, operand 3, single buffered']
    #allocation3 [shape = 's32[1]{0}', space=sflag, size = 0x4, scoped, tag = 'scoped memory for tpu_custom_call.1']
    #allocation4 [shape = 's32[1]{0}', space=sflag, size = 0x4, scoped, tag = 'scoped memory for tpu_custom_call.1']
    #allocation5 [shape = 'u8[8192]{0}', space=vmem, size = 0x2000, scoped, tag = 'output window, operand 0, single buffered']
    %10 = vsyncpa [#allocation3], 0
    %11 = vsyncpa [#allocation4], 0
    // Predicated region
    $region2: #{tpu_custom_call.1} parent=1 // pred_check
      _
    $region3: #{tpu_custom_call.1} parent=1 // pred_check_branch
      %13 = sbr.rel (0) target = $region5
    $region4: #{tpu_custom_call.1} parent=1 // pred_region
      _
    $region5: #{tpu_custom_call.1} parent=1 // pred_fallthru
      _
    // Predicated region
    $region6: #{tpu_custom_call.1} parent=1 // pred_check
      _
    $region7: #{tpu_custom_call.1} parent=1 // pred_check_branch
      %15 = sbr.rel (0) target = $region9
    $region8: #{tpu_custom_call.1} parent=1 // pred_region
      _
    $region9: #{tpu_custom_call.1} parent=1 // pred_fallthru
      _
    // Predicated region
    $region10: #{tpu_custom_call.1} parent=1 // pred_check
      _
    $region11: #{tpu_custom_call.1} parent=1 // pred_check_branch
      %17 = sbr.rel (0) target = $region13
    $region12: #{tpu_custom_call.1} parent=1 // pred_region
      _
    $region13: #{tpu_custom_call.1} parent=1 // pred_fallthru
      _
    // Predicated region
    $region14: #{tpu_custom_call.1} parent=1 // pred_check
      _
    $region15: #{tpu_custom_call.1} parent=1 // pred_check_branch
      %19 = sbr.rel (0) target = $region17
    $region16: #{tpu_custom_call.1} parent=1 // pred_region
      %21 = vsyncadd [#allocation3], 0
      %s22 = sshll.u32 %s3, 4
      %s23 = int_to_ptr.hbm [resolvable:$true] %s22
      %s24 = sshll.u32 [#allocation2], 4
      %s25 = int_to_ptr.vmem [resolvable:$true] %s24
      %30 = dma.hbm_to_vmem [thread:$0]  %s23, 256, %s25, [#allocation3], 128, 128, 8
    $region17: #{tpu_custom_call.1} parent=1 // pred_fallthru
      _
    // Predicated region
    $region18: #{tpu_custom_call.1} parent=1 // pred_check
      _
    $region19: #{tpu_custom_call.1} parent=1 // pred_check_branch
      %32 = sbr.rel (0) target = $region21
    $region20: #{tpu_custom_call.1} parent=1 // pred_region
      _
    $region21: #{tpu_custom_call.1} parent=1 // pred_fallthru
      _
    // Predicated region
    $region22: #{tpu_custom_call.1} parent=1 // pred_check
      _
    $region23: #{tpu_custom_call.1} parent=1 // pred_check_branch
      %34 = sbr.rel (0) target = $region25
    $region24: #{tpu_custom_call.1} parent=1 // pred_region
      %36 = dma.done [#allocation3], 256
    $region25: #{tpu_custom_call.1} parent=1 // pred_fallthru
      _
    %v37 = vld [vmem:[%s0] sm:$0xff]
    %v38 = vld [vmem:[%s0 + $0x8] sm:$0x3]
    %v39 = vld [vmem:[%s1] sm:$0xff]
    %v40 = vld [vmem:[%s1 + $0x8] sm:$0x3]
    %v41 = vld [vmem:[%s2] sm:$0xff]
    %v42 = vld [vmem:[%s2 + $0x8] sm:$0x3]
    %44 = vset.pattern.permute.xlu0 0
    %45 = vperm.xlu0 %44, %v41
    %v46 = vpop.permute.xlu0 %45
    %49 = vset.pattern.permute.xlu0 0
    %50 = vperm.xlu0 %49, %v42
    %v51 = vpop.permute.xlu0 %50
    %vm53 = vcmask 80896
    %v55 = vsel %vm53, %v39, 0
    %v58 = vsel %vm53, %v40, 0
    %vm60 = vcmask 1041408
    %v62 = vsel %vm60, %v38, 0
    %64 = vmatpush.msra.mxu0 0.0
    %65 = vmatpush.msra.mxu0 0.0
    %66 = vmatpush.msra.mxu0 0.0
    %67 = vmatpush.msra.mxu0 0.0
    %68 = vmatpush.msra.mxu0 0.0
    %69 = vmatpush.msra.mxu0 0.0
    %70 = vmatpush.msra.mxu0 0.0
    %71 = vmatpush.msra.mxu0 0.0
    %72 = vmatpush.msra.mxu0 0.0
    %73 = vmatpush.msra.mxu0 0.0
    %74 = vmatpush.msra.mxu0 0.0
    %75 = vmatpush.msra.mxu0 0.0
    %76 = vmatpush.msra.mxu0 0.0
    %77 = vmatpush.msra.mxu0 0.0
    %78 = vmatpush.msra.mxu0 %v62
    %79 = vmatpush.msra.mxu0 %v37
    %80 = vmatmul.f32.gmra.mxu0 %v55
    %v81 = vpop.f32.mrf.mxu0
    %v82 = vadd.f32 %v46, %v81
    %83 = vmatmul.f32.gmra.mxu0 %v58
    %v84 = vpop.f32.mrf.mxu0
    %v85 = vadd.f32 %v51, %v84
    %86 = vdwg.mxu0
    %v87 = vmax.f32 %v82, 0.0
    %v88 = vmax.f32 %v85, 0.0
    %v89 = vld [vmem:[#allocation2] sm:$0xff]
    %v90 = vld [vmem:[#allocation2 + $0x8] sm:$0x3]
    %v91 = vld [vmem:[%s4] sm:$0xff]
    %v92 = vld [vmem:[%s4 + $0x8] sm:$0x3]
    %94 = vset.pattern.permute.xlu0 0
    %95 = vperm.xlu0 %94, %v91
    %v96 = vpop.permute.xlu0 %95
    %99 = vset.pattern.permute.xlu0 0
    %100 = vperm.xlu0 %99, %v92
    %v101 = vpop.permute.xlu0 %100
    %v104 = vsel %vm53, %v89, 0
    %v107 = vsel %vm53, %v90, 0
    %v110 = vsel %vm60, %v88, 0
    %112 = vmatpush.msra.mxu0 0.0
    %113 = vmatpush.msra.mxu0 0.0
    %114 = vmatpush.msra.mxu0 0.0
    %115 = vmatpush.msra.mxu0 0.0
    %116 = vmatpush.msra.mxu0 0.0
    %117 = vmatpush.msra.mxu0 0.0
    %118 = vmatpush.msra.mxu0 0.0
    %119 = vmatpush.msra.mxu0 0.0
    %120 = vmatpush.msra.mxu0 0.0
    %121 = vmatpush.msra.mxu0 0.0
    %122 = vmatpush.msra.mxu0 0.0
    %123 = vmatpush.msra.mxu0 0.0
    %124 = vmatpush.msra.mxu0 0.0
    %125 = vmatpush.msra.mxu0 0.0
    %126 = vmatpush.msra.mxu0 %v110
    %127 = vmatpush.msra.mxu0 %v87
    %128 = vmatmul.f32.gmra.mxu0 %v104
    %v129 = vpop.f32.mrf.mxu0
    %v130 = vadd.f32 %v96, %v129
    %131 = vmatmul.f32.gmra.mxu0 %v107
    %v132 = vpop.f32.mrf.mxu0
    %v133 = vadd.f32 %v101, %v132
    %134 = vdwg.mxu0
    %v135 = vmul.f32 %v130, 0.5
    %v136 = vmul.f32 %v133, 0.5
    %v137 = vtanh.pop %v135
    %v138 = vtanh.pop %v136
    %v139 = vadd.f32 %v137, 1.0
    %v140 = vadd.f32 %v138, 1.0
    %v141 = vmul.f32 %v139, 0.5
    %v142 = vmul.f32 %v140, 0.5
    %143 = vst [vmem:[#allocation5] sm:$0xff] %v141
    %144 = vst [vmem:[#allocation5 + $0x8] sm:$0x3] %v142
    // Predicated region
    $region26: #{tpu_custom_call.1} parent=1 // pred_check
      _
    $region27: #{tpu_custom_call.1} parent=1 // pred_check_branch
      %146 = sbr.rel (0) target = $region29
    $region28: #{tpu_custom_call.1} parent=1 // pred_region
      %148 = vsyncadd [#allocation4], 0
      %s149 = sshll.u32 [#allocation5], 4
      %s150 = int_to_ptr.vmem [resolvable:$true] %s149
      %s151 = sshll.u32 %s5, 4
      %s152 = int_to_ptr.hbm [resolvable:$true] %s151
      %157 = dma.vmem_to_hbm [thread:$0]  %s150, 256, %s152, [#allocation4], 128, 128, 8
    $region29: #{tpu_custom_call.1} parent=1 // pred_fallthru
      _
    // Predicated region
    $region30: #{tpu_custom_call.1} parent=1 // pred_check
      _
    $region31: #{tpu_custom_call.1} parent=1 // pred_check_branch
      %159 = sbr.rel (0) target = $region33
    $region32: #{tpu_custom_call.1} parent=1 // pred_region
      %161 = dma.done [#allocation4], 256
    $region33: #{tpu_custom_call.1} parent=1 // pred_fallthru
      _
    %162 = vsyncpa [#allocation3], 1
    %163 = vsyncpa [#allocation4], 1

</llo_original>
